<compile_context>
chip_gen: v6e
topology: v6e:2x2x1
jax: 0.10.0
libtpu: 0.0.40
codegen_flags: <defaults>
</compile_context>

<pallas_src>
import functools

import jax
import jax.numpy as jnp
from jax.experimental import pallas as pl
from jax.experimental.pallas import tpu as pltpu


def _pu_loss_kernel(inp_ref, tgt_ref, out_ref, acc_ref, *,
                    prior, gamma, beta, nnPU):
    """One grid step over a lane-dense (2, TILE_N) logit tile.

    inp_ref: (2, T) logits  (class dim on sublanes, samples on lanes)
    tgt_ref: (1, T) int32 labels; padded samples carry -1 (excluded everywhere)
    out_ref: (1, 1) f32 SMEM scalar loss (written only on the last grid step)
    acc_ref: (5,) f32 SMEM running sums:
             [sum_pos_bce01, sum_pos_bce10, sum_unl_bce10, n_pos, n_unl]
    """
    step = pl.program_id(0)

    @pl.when(step == 0)
    def _init():
        for i in range(5):
            acc_ref[i] = 0.0

    z = inp_ref[...].astype(jnp.float32)          # (2, T)
    t = tgt_ref[...]                              # (1, T) int32

    # log(sigmoid(z)) = -softplus(-z), log(1 - sigmoid(z)) = -softplus(z);
    # softplus(+-z) share one exp/log via log(1 + exp(-|z|)).
    # The -100 clamp mirrors torch.nn.BCELoss behavior when sigmoid saturates.
    lg = jnp.log(1.0 + jnp.exp(-jnp.abs(z)))      # (2, T)
    relu = jnp.maximum(z, 0.0)
    log_sig = jnp.maximum(-(relu - z + lg), -100.0)    # log sigmoid(z)
    log_1msig = jnp.maximum(-(relu + lg), -100.0)      # log(1 - sigmoid(z))

    # target == 1 -> one-hot [0, 1];  target == 0 (or inverse of 1) -> [1, 0]
    bce_y01 = -(log_1msig[0:1, :] + log_sig[1:2, :])   # (1, T)
    bce_y10 = -(log_sig[0:1, :] + log_1msig[1:2, :])   # (1, T)

    pos = (t == 1).astype(jnp.float32)            # (1, T)
    unl = (t == 0).astype(jnp.float32)            # (1, T); padding (-1) excluded

    acc_ref[0] += jnp.sum(pos * bce_y01)
    acc_ref[1] += jnp.sum(pos * bce_y10)
    acc_ref[2] += jnp.sum(unl * bce_y10)
    acc_ref[3] += jnp.sum(pos)
    acc_ref[4] += jnp.sum(unl)

    @pl.when(step == pl.num_programs(0) - 1)
    def _finalize():
        n_pos = jnp.maximum(1.0, acc_ref[3])      # torch.max(min_count, sum)
        n_unl = jnp.maximum(1.0, acc_ref[4])
        y_positive = acc_ref[0] / n_pos
        y_positive_inv = acc_ref[1] / n_pos
        y_unlabeled = acc_ref[2] / n_unl
        positive_risk = prior * y_positive
        negative_risk = -prior * y_positive_inv + y_unlabeled
        if nnPU:
            result = jnp.where(negative_risk < -beta,
                               -gamma * negative_risk,
                               positive_risk + negative_risk)
        else:
            result = positive_risk + negative_risk
        out_ref[0, 0] = result


def pu_loss(inp, target, *, prior, gamma=1.0, beta=0.0, nnPU=False, tile_n=2048):
    """Pallas-TPU PULoss.forward.  inp: (N, 2) logits, target: (N,) int {0,1}."""
    if not 0.0 < prior < 1.0:
        raise NotImplementedError("The class prior should be in (0, 1)")
    N, C = inp.shape
    assert C == 2, "PULoss one-hot path assumes num_classes == 2"

    # Lane-dense layout: samples on the lane (last) dim. Input dtype is passed
    # through (bf16 callers keep bf16 HBM traffic); cast happens in-kernel.
    logits = jnp.transpose(inp)                       # (2, N)
    tgt = target.astype(jnp.int32).reshape(1, N)      # (1, N)

    # Pad N to a multiple of a 128-aligned tile; padded labels = -1 so they fall
    # out of both the positive and the unlabeled masks.
    n128 = ((N + 127) // 128) * 128
    tile = min(int(tile_n), n128)
    n_pad = ((n128 + tile - 1) // tile) * tile
    if n_pad != N:
        logits = jnp.pad(logits, ((0, 0), (0, n_pad - N)))
        tgt = jnp.pad(tgt, ((0, 0), (0, n_pad - N)), constant_values=-1)

    kernel = functools.partial(
        _pu_loss_kernel,
        prior=float(prior), gamma=float(gamma), beta=float(beta), nnPU=bool(nnPU))

    out = pl.pallas_call(
        kernel,
        grid=(n_pad // tile,),
        out_shape=jax.ShapeDtypeStruct((1, 1), jnp.float32),
        in_specs=[
            pl.BlockSpec((2, tile), lambda i: (0, i)),
            pl.BlockSpec((1, tile), lambda i: (0, i)),
        ],
        out_specs=pl.BlockSpec((1, 1), lambda i: (0, 0),
                               memory_space=pltpu.MemorySpace.SMEM),
        scratch_shapes=[pltpu.SMEM((5,), jnp.float32)],
        compiler_params=pltpu.CompilerParams(
            dimension_semantics=("arbitrary",)),
    )(logits, tgt)
    return out[0, 0]


def _ref_pu_loss(inp, target, *, prior, gamma=1.0, beta=0.0, nnPU=False):
    """Pure-JAX reference mirroring the PyTorch forward (clamped BCELoss)."""
    x = jax.nn.sigmoid(inp.astype(jnp.float32))
    pos = (target == 1).astype(jnp.float32)
    unl = (target == 0).astype(jnp.float32)
    n_pos = jnp.maximum(1.0, pos.sum())
    n_unl = jnp.maximum(1.0, unl.sum())
    log_x = jnp.maximum(jnp.log(x), -100.0)
    log_1mx = jnp.maximum(jnp.log(1.0 - x), -100.0)
    bce_y01 = -(log_1mx[:, 0] + log_x[:, 1])
    bce_y10 = -(log_x[:, 0] + log_1mx[:, 1])
    y_positive = (pos * bce_y01).sum() / n_pos
    y_positive_inv = (pos * bce_y10).sum() / n_pos
    y_unlabeled = (unl * bce_y10).sum() / n_unl
    positive_risk = prior * y_positive
    negative_risk = -prior * y_positive_inv + y_unlabeled
    if nnPU:
        return jnp.where(negative_risk < -beta,
                         -gamma * negative_risk,
                         positive_risk + negative_risk)
    return positive_risk + negative_risk


if __name__ == "__main__":
    key = jax.random.PRNGKey(0)
    k1, k2, k3, k4 = jax.random.split(key, 4)

    prior, gamma, beta = 0.3, 1.0, 0.0

    # Small case (single tile) — both uPU and nnPU paths.
    N = 8
    inp = jax.random.normal(k1, (N, 2), dtype=jnp.float32)
    target = jax.random.bernoulli(k2, p=0.5, shape=(N,)).astype(jnp.int32)
    for nnPU in (False, True):
        out = jax.block_until_ready(
            pu_loss(inp, target, prior=prior, gamma=gamma, beta=beta, nnPU=nnPU))
        ref = _ref_pu_loss(inp, target, prior=prior, gamma=gamma, beta=beta, nnPU=nnPU)
        assert jnp.allclose(out, ref, rtol=1e-5, atol=1e-5), (nnPU, out, ref)

    # Moderate case with a multi-step grid to exercise the accumulator path.
    N2 = 1000
    inp2 = jax.random.normal(k3, (N2, 2), dtype=jnp.float32)
    target2 = jax.random.bernoulli(k4, p=0.4, shape=(N2,)).astype(jnp.int32)
    out2 = jax.block_until_ready(
        pu_loss(inp2, target2, prior=prior, nnPU=False, tile_n=256))
    ref2 = _ref_pu_loss(inp2, target2, prior=prior, nnPU=False)
    assert jnp.allclose(out2, ref2, rtol=1e-4, atol=1e-5), (out2, ref2)

    print("KERNEL_OK")
</pallas_src>

<mosaic_0001>
module attributes {stable_mosaic.version = 11 : i64} {
  func.func @_pu_loss_kernel(%arg0: i32, %arg1: memref<2x128xf32, #tpu.memory_space<vmem>>, %arg2: memref<1x128xi32, #tpu.memory_space<vmem>>, %arg3: memref<1x1xf32, #tpu.memory_space<smem>>, %arg4: memref<5xf32, #tpu.memory_space<smem>>) attributes {dimension_semantics = [#tpu.dimension_semantics<arbitrary>], iteration_bounds = array<i64: 1>, scalar_prefetch = 0 : i64, scratch_operands = 1 : i64, tpu.core_type = #tpu.core_type<tc>, window_params = [{transform_indices = @transform_0, window_bounds = array<i64: 2, 128>}, {transform_indices = @transform_1, window_bounds = array<i64: 1, 128>}, {transform_indices = @transform_2, window_bounds = array<i64: 1, 1>}]} {
    %c0_i32 = arith.constant 0 : i32
    %0 = arith.cmpi eq, %arg0, %c0_i32 : i32
    %1 = arith.extui %0 : i1 to i32
    %c0_i32_0 = arith.constant 0 : i32
    %2 = arith.cmpi ne, %1, %c0_i32_0 : i32
    scf.if %2 {
      %cst_26 = arith.constant 0.000000e+00 : f32
      %c0_27 = arith.constant 0 : index
      %84 = memref.load %arg4[%c0_27] : memref<5xf32, #tpu.memory_space<smem>>
      memref.store %cst_26, %arg4[%c0_27] : memref<5xf32, #tpu.memory_space<smem>>
      %cst_28 = arith.constant 0.000000e+00 : f32
      %c1_29 = arith.constant 1 : index
      %85 = memref.load %arg4[%c1_29] : memref<5xf32, #tpu.memory_space<smem>>
      memref.store %cst_28, %arg4[%c1_29] : memref<5xf32, #tpu.memory_space<smem>>
      %cst_30 = arith.constant 0.000000e+00 : f32
      %c2_31 = arith.constant 2 : index
      %86 = memref.load %arg4[%c2_31] : memref<5xf32, #tpu.memory_space<smem>>
      memref.store %cst_30, %arg4[%c2_31] : memref<5xf32, #tpu.memory_space<smem>>
      %cst_32 = arith.constant 0.000000e+00 : f32
      %c3_33 = arith.constant 3 : index
      %87 = memref.load %arg4[%c3_33] : memref<5xf32, #tpu.memory_space<smem>>
      memref.store %cst_32, %arg4[%c3_33] : memref<5xf32, #tpu.memory_space<smem>>
      %cst_34 = arith.constant 0.000000e+00 : f32
      %c4_35 = arith.constant 4 : index
      %88 = memref.load %arg4[%c4_35] : memref<5xf32, #tpu.memory_space<smem>>
      memref.store %cst_34, %arg4[%c4_35] : memref<5xf32, #tpu.memory_space<smem>>
    } else {
    }
    %c0 = arith.constant 0 : index
    %c0_1 = arith.constant 0 : index
    %3 = vector.load %arg1[%c0, %c0_1] : memref<2x128xf32, #tpu.memory_space<vmem>>, vector<2x128xf32>
    %c0_2 = arith.constant 0 : index
    %c0_3 = arith.constant 0 : index
    %4 = vector.load %arg2[%c0_2, %c0_3] : memref<1x128xi32, #tpu.memory_space<vmem>>, vector<1x128xi32>
    %5 = math.absf %3 : vector<2x128xf32>
    %cst = arith.constant 0.000000e+00 : f32
    %6 = vector.broadcast %cst : f32 to vector<2x128xf32>
    %7 = arith.subf %6, %5 : vector<2x128xf32>
    %8 = math.exp %7 : vector<2x128xf32>
    %cst_4 = arith.constant 1.000000e+00 : f32
    %9 = vector.broadcast %cst_4 : f32 to vector<2x128xf32>
    %10 = arith.addf %9, %8 : vector<2x128xf32>
    %11 = math.log %10 : vector<2x128xf32>
    %cst_5 = arith.constant 0.000000e+00 : f32
    %12 = vector.broadcast %cst_5 : f32 to vector<2x128xf32>
    %13 = arith.maximumf %3, %12 : vector<2x128xf32>
    %14 = arith.subf %13, %3 : vector<2x128xf32>
    %15 = arith.addf %14, %11 : vector<2x128xf32>
    %cst_6 = arith.constant 0.000000e+00 : f32
    %16 = vector.broadcast %cst_6 : f32 to vector<2x128xf32>
    %17 = arith.subf %16, %15 : vector<2x128xf32>
    %cst_7 = arith.constant -1.000000e+02 : f32
    %18 = vector.broadcast %cst_7 : f32 to vector<2x128xf32>
    %19 = arith.maximumf %17, %18 : vector<2x128xf32>
    %20 = arith.addf %13, %11 : vector<2x128xf32>
    %cst_8 = arith.constant 0.000000e+00 : f32
    %21 = vector.broadcast %cst_8 : f32 to vector<2x128xf32>
    %22 = arith.subf %21, %20 : vector<2x128xf32>
    %cst_9 = arith.constant -1.000000e+02 : f32
    %23 = vector.broadcast %cst_9 : f32 to vector<2x128xf32>
    %24 = arith.maximumf %22, %23 : vector<2x128xf32>
    %25 = vector.extract_strided_slice %24 {offsets = [0, 0], sizes = [1, 128], strides = [1, 1]} : vector<2x128xf32> to vector<1x128xf32>
    %26 = vector.extract_strided_slice %19 {offsets = [1, 0], sizes = [1, 128], strides = [1, 1]} : vector<2x128xf32> to vector<1x128xf32>
    %27 = arith.addf %25, %26 : vector<1x128xf32>
    %cst_10 = arith.constant 0.000000e+00 : f32
    %28 = vector.broadcast %cst_10 : f32 to vector<1x128xf32>
    %29 = arith.subf %28, %27 : vector<1x128xf32>
    %30 = vector.extract_strided_slice %19 {offsets = [0, 0], sizes = [1, 128], strides = [1, 1]} : vector<2x128xf32> to vector<1x128xf32>
    %31 = vector.extract_strided_slice %24 {offsets = [1, 0], sizes = [1, 128], strides = [1, 1]} : vector<2x128xf32> to vector<1x128xf32>
    %32 = arith.addf %30, %31 : vector<1x128xf32>
    %cst_11 = arith.constant 0.000000e+00 : f32
    %33 = vector.broadcast %cst_11 : f32 to vector<1x128xf32>
    %34 = arith.subf %33, %32 : vector<1x128xf32>
    %c1_i32 = arith.constant 1 : i32
    %35 = vector.broadcast %c1_i32 : i32 to vector<1x128xi32>
    %36 = arith.cmpi eq, %4, %35 : vector<1x128xi32>
    %37 = arith.extui %36 : vector<1x128xi1> to vector<1x128xi32>
    %38 = arith.sitofp %37 : vector<1x128xi32> to vector<1x128xf32>
    %c0_i32_12 = arith.constant 0 : i32
    %39 = vector.broadcast %c0_i32_12 : i32 to vector<1x128xi32>
    %40 = arith.cmpi eq, %4, %39 : vector<1x128xi32>
    %41 = arith.extui %40 : vector<1x128xi1> to vector<1x128xi32>
    %42 = arith.sitofp %41 : vector<1x128xi32> to vector<1x128xf32>
    %c0_13 = arith.constant 0 : index
    %43 = memref.load %arg4[%c0_13] : memref<5xf32, #tpu.memory_space<smem>>
    %44 = arith.mulf %38, %29 : vector<1x128xf32>
    %45 = vector.shape_cast %44 : vector<1x128xf32> to vector<1x1x128xf32>
    %cst_14 = arith.constant dense<0.000000e+00> : vector<1xf32>
    %46 = vector.multi_reduction <add>, %45, %cst_14 [1, 2] : vector<1x1x128xf32> to vector<1xf32>
    %47 = vector.shape_cast %46 : vector<1xf32> to vector<1x1x1xf32>
    %48 = vector.extract %47[0, 0, 0] : f32 from vector<1x1x1xf32>
    %49 = arith.addf %43, %48 : f32
    %c0_15 = arith.constant 0 : index
    %50 = memref.load %arg4[%c0_15] : memref<5xf32, #tpu.memory_space<smem>>
    memref.store %49, %arg4[%c0_15] : memref<5xf32, #tpu.memory_space<smem>>
    %c1 = arith.constant 1 : index
    %51 = memref.load %arg4[%c1] : memref<5xf32, #tpu.memory_space<smem>>
    %52 = arith.mulf %38, %34 : vector<1x128xf32>
    %53 = vector.shape_cast %52 : vector<1x128xf32> to vector<1x1x128xf32>
    %cst_16 = arith.constant dense<0.000000e+00> : vector<1xf32>
    %54 = vector.multi_reduction <add>, %53, %cst_16 [1, 2] : vector<1x1x128xf32> to vector<1xf32>
    %55 = vector.shape_cast %54 : vector<1xf32> to vector<1x1x1xf32>
    %56 = vector.extract %55[0, 0, 0] : f32 from vector<1x1x1xf32>
    %57 = arith.addf %51, %56 : f32
    %c1_17 = arith.constant 1 : index
    %58 = memref.load %arg4[%c1_17] : memref<5xf32, #tpu.memory_space<smem>>
    memref.store %57, %arg4[%c1_17] : memref<5xf32, #tpu.memory_space<smem>>
    %c2 = arith.constant 2 : index
    %59 = memref.load %arg4[%c2] : memref<5xf32, #tpu.memory_space<smem>>
    %60 = arith.mulf %42, %34 : vector<1x128xf32>
    %61 = vector.shape_cast %60 : vector<1x128xf32> to vector<1x1x128xf32>
    %cst_18 = arith.constant dense<0.000000e+00> : vector<1xf32>
    %62 = vector.multi_reduction <add>, %61, %cst_18 [1, 2] : vector<1x1x128xf32> to vector<1xf32>
    %63 = vector.shape_cast %62 : vector<1xf32> to vector<1x1x1xf32>
    %64 = vector.extract %63[0, 0, 0] : f32 from vector<1x1x1xf32>
    %65 = arith.addf %59, %64 : f32
    %c2_19 = arith.constant 2 : index
    %66 = memref.load %arg4[%c2_19] : memref<5xf32, #tpu.memory_space<smem>>
    memref.store %65, %arg4[%c2_19] : memref<5xf32, #tpu.memory_space<smem>>
    %c3 = arith.constant 3 : index
    %67 = memref.load %arg4[%c3] : memref<5xf32, #tpu.memory_space<smem>>
    %68 = vector.shape_cast %38 : vector<1x128xf32> to vector<1x1x128xf32>
    %cst_20 = arith.constant dense<0.000000e+00> : vector<1xf32>
    %69 = vector.multi_reduction <add>, %68, %cst_20 [1, 2] : vector<1x1x128xf32> to vector<1xf32>
    %70 = vector.shape_cast %69 : vector<1xf32> to vector<1x1x1xf32>
    %71 = vector.extract %70[0, 0, 0] : f32 from vector<1x1x1xf32>
    %72 = arith.addf %67, %71 : f32
    %c3_21 = arith.constant 3 : index
    %73 = memref.load %arg4[%c3_21] : memref<5xf32, #tpu.memory_space<smem>>
    memref.store %72, %arg4[%c3_21] : memref<5xf32, #tpu.memory_space<smem>>
    %c4 = arith.constant 4 : index
    %74 = memref.load %arg4[%c4] : memref<5xf32, #tpu.memory_space<smem>>
    %75 = vector.shape_cast %42 : vector<1x128xf32> to vector<1x1x128xf32>
    %cst_22 = arith.constant dense<0.000000e+00> : vector<1xf32>
    %76 = vector.multi_reduction <add>, %75, %cst_22 [1, 2] : vector<1x1x128xf32> to vector<1xf32>
    %77 = vector.shape_cast %76 : vector<1xf32> to vector<1x1x1xf32>
    %78 = vector.extract %77[0, 0, 0] : f32 from vector<1x1x1xf32>
    %79 = arith.addf %74, %78 : f32
    %c4_23 = arith.constant 4 : index
    %80 = memref.load %arg4[%c4_23] : memref<5xf32, #tpu.memory_space<smem>>
    memref.store %79, %arg4[%c4_23] : memref<5xf32, #tpu.memory_space<smem>>
    %c0_i32_24 = arith.constant 0 : i32
    %81 = arith.cmpi eq, %arg0, %c0_i32_24 : i32
    %82 = arith.extui %81 : i1 to i32
    %c0_i32_25 = arith.constant 0 : i32
    %83 = arith.cmpi ne, %82, %c0_i32_25 : i32
    scf.if %83 {
      %c3_26 = arith.constant 3 : index
      %84 = memref.load %arg4[%c3_26] : memref<5xf32, #tpu.memory_space<smem>>
      %cst_27 = arith.constant 1.000000e+00 : f32
      %85 = arith.maximumf %cst_27, %84 : f32
      %c4_28 = arith.constant 4 : index
      %86 = memref.load %arg4[%c4_28] : memref<5xf32, #tpu.memory_space<smem>>
      %cst_29 = arith.constant 1.000000e+00 : f32
      %87 = arith.maximumf %cst_29, %86 : f32
      %c0_30 = arith.constant 0 : index
      %88 = memref.load %arg4[%c0_30] : memref<5xf32, #tpu.memory_space<smem>>
      %89 = arith.divf %88, %85 : f32
      %c1_31 = arith.constant 1 : index
      %90 = memref.load %arg4[%c1_31] : memref<5xf32, #tpu.memory_space<smem>>
      %91 = arith.divf %90, %85 : f32
      %c2_32 = arith.constant 2 : index
      %92 = memref.load %arg4[%c2_32] : memref<5xf32, #tpu.memory_space<smem>>
      %93 = arith.divf %92, %87 : f32
      %cst_33 = arith.constant 3.000000e-01 : f32
      %94 = arith.mulf %cst_33, %89 : f32
      %cst_34 = arith.constant -3.000000e-01 : f32
      %95 = arith.mulf %cst_34, %91 : f32
      %96 = arith.addf %95, %93 : f32
      %97 = arith.addf %94, %96 : f32
      %c0_35 = arith.constant 0 : index
      %c0_36 = arith.constant 0 : index
      %98 = memref.load %arg3[%c0_35, %c0_36] : memref<1x1xf32, #tpu.memory_space<smem>>
      memref.store %97, %arg3[%c0_35, %c0_36] : memref<1x1xf32, #tpu.memory_space<smem>>
    } else {
    }
    return
  }
  func.func @transform_0(%arg0: i32) -> (i32, i32) {
    %c0_i32 = arith.constant 0 : i32
    %c0_i32_0 = arith.constant 0 : i32
    return %c0_i32, %arg0 : i32, i32
  }
  func.func @transform_1(%arg0: i32) -> (i32, i32) {
    %c0_i32 = arith.constant 0 : i32
    %c0_i32_0 = arith.constant 0 : i32
    return %c0_i32, %arg0 : i32, i32
  }
  func.func @transform_2(%arg0: i32) -> (i32, i32) {
    %c0_i32 = arith.constant 0 : i32
    %c0_i32_0 = arith.constant 0 : i32
    %c0_i32_1 = arith.constant 0 : i32
    return %c0_i32, %c0_i32_0 : i32, i32
  }
}

</mosaic_0001>

<llo_original>
// kernel: tpu_custom_call.1
$region0: #{tpu_custom_call.1}
  #allocation0 [shape = 'u32[]', space=smem, size = 0x4, offset = 0x4, fixed_abs, tag = 'smem constant byte address 0x4 - core index']
  #allocation1 [shape = 'u32[144,128]{1,0:T(1,128)}', space=vmem, size = 0x12000, scoped, tag = 'internal scratch']
  #allocation2 [shape = 'f32[5]{0:T(128)}', space=smem, size = 0x200, scoped, tag = 'scratch operand']
  %s0 = inlined_call_operand.hbm [shape: f32[2,128], index: 0, kind: input, shape index: {}]
  %s1 = inlined_call_operand.vmem [shape: s32[1,128], index: 1, kind: input, shape index: {}]
  %s2 = inlined_call_operand.hbm [shape: f32[1,1], index: 2, kind: output, shape index: {}]
  %s3 = sld [smem:[#allocation0]]
  $region30: #{tpu_custom_call.1} parent=0
    _
  %s5 = ssub.s32 1, %s3
  %s6 = scalar_select 0, %s5, %s3
  $region1: #{tpu_custom_call.1} parent=0
    #allocation3 [shape = 'u8[1024]{0}', space=vmem, size = 0x400, scoped, tag = 'input window, operand 0, single buffered']
    #allocation4 [shape = 's32[1]{0}', space=sflag, size = 0x4, scoped, tag = 'scoped memory for tpu_custom_call.1']
    #allocation5 [shape = 's32[1]{0}', space=sflag, size = 0x4, scoped, tag = 'scoped memory for tpu_custom_call.1']
    #allocation6 [shape = 'u8[512]{0}', space=smem, size = 0x200, scoped, tag = 'output window, operand 0, single buffered']
    %7 = vsyncpa [#allocation4], 0
    %8 = vsyncpa [#allocation5], 0
    // Predicated region
    $region2: #{tpu_custom_call.1} parent=1 // pred_check
      _
    $region3: #{tpu_custom_call.1} parent=1 // pred_check_branch
      %10 = sbr.rel (0) target = $region5
    $region4: #{tpu_custom_call.1} parent=1 // pred_region
      %s12 = ssub.s32 32, 32
      %13 = vsyncadd [#allocation4], %s12
      %s15 = sshll.u32 [#allocation3], 4
      %s16 = int_to_ptr.vmem [resolvable:$true] %s15
      %18 = dma.hbm_to_vmem [thread:$0]  %s0, 32, %s16, [#allocation4]
    $region5: #{tpu_custom_call.1} parent=1 // pred_fallthru
      _
    // Predicated region
    $region6: #{tpu_custom_call.1} parent=1 // pred_check
      _
    $region7: #{tpu_custom_call.1} parent=1 // pred_check_branch
      %20 = sbr.rel (0) target = $region9
    $region8: #{tpu_custom_call.1} parent=1 // pred_region
      _
    $region9: #{tpu_custom_call.1} parent=1 // pred_fallthru
      _
    // Predicated region
    $region10: #{tpu_custom_call.1} parent=1 // pred_check
      _
    $region11: #{tpu_custom_call.1} parent=1 // pred_check_branch
      %22 = sbr.rel (0) target = $region13
    $region12: #{tpu_custom_call.1} parent=1 // pred_region
      %23 = dma.done [#allocation4], 32
    $region13: #{tpu_custom_call.1} parent=1 // pred_fallthru
      _
    %p24 = scmp.eq.s32.totalorder 0, 0
    // Predicated region
    $region14: #{tpu_custom_call.1} parent=1 // pred_check
      %p25 = pneg %p24
    $region15: #{tpu_custom_call.1} parent=1 // pred_check_branch
      %27 = sbr.rel (%p25) target = $region17
    $region16: #{tpu_custom_call.1} parent=1 // pred_region
      %s28 = scalar_lea.smem [#allocation2], 0
      %29 = sst [smem:[%s28]] 0.0
      %s30 = scalar_lea.smem [#allocation2], 1
      %31 = sst [smem:[%s30]] 0.0
      %s32 = scalar_lea.smem [#allocation2], 2
      %33 = sst [smem:[%s32]] 0.0
      %s34 = scalar_lea.smem [#allocation2], 3
      %35 = sst [smem:[%s34]] 0.0
      %s36 = scalar_lea.smem [#allocation2], 4
      %37 = sst [smem:[%s36]] 0.0
    $region17: #{tpu_custom_call.1} parent=1 // pred_fallthru
      _
    %v38 = vld [vmem:[#allocation3] sm:$0x3]
    %v39 = vld [vmem:[%s1] sm:$0x1]
    %v40 = vand.u32 2147483647, %v38
    %v41 = vsub.f32 0.0, %v40
    %v42 = vmul.f32 %v41, 1.442695
    %v43 = vpow.pop %v42
    %v44 = vadd.f32 %v43, 1.0
    %v45 = vlog2.pop %v44
    %v46 = vmul.f32 %v45, 0.6931472
    %v47 = vmax.f32 %v38, 0.0
    %v48 = vsub.f32 %v47, %v38
    %v49 = vadd.f32 %v48, %v46
    %v50 = vsub.f32 0.0, %v49
    %v51 = vmax.f32 %v50, -100.0
    %v52 = vadd.f32 %v47, %v46
    %v53 = vsub.f32 0.0, %v52
    %v54 = vmax.f32 %v53, -100.0
    %v56 = vrot.slane %v51, 1
    %v58 = vadd.f32 %v54, %v56
    %v59 = vsub.f32 0.0, %v58
    %v61 = vrot.slane %v54, 1
    %v63 = vadd.f32 %v51, %v61
    %v64 = vsub.f32 0.0, %v63
    %vm65 = vcmp.eq.s32.totalorder %v39, 1
    %v66 = vsel %vm65, 1, 0
    %v67 = vcvt.s32.f32 %v66
    %vm68 = vcmp.eq.s32.totalorder %v39, 0
    %v69 = vsel %vm68, 1, 0
    %v70 = vcvt.s32.f32 %v69
    %s71 = sld [smem:[#allocation2]]
    %v72 = vmul.f32 %v67, %v59
    %vm73 = vcmask 1040384
    %v74 = vsel %vm73, %v72, 0.0
    %75 = vadd.xlane.f32.xlu0 %v74
    %v76 = vpop.xlane.xlu0 %75
    %v77 = vrot.slane %v76, 4
    %v78 = vadd.f32 %v76, %v77
    %v79 = vrot.slane %v78, 2
    %v80 = vadd.f32 %v78, %v79
    %v81 = vrot.slane %v80, 1
    %v82 = vadd.f32 %v80, %v81
    %s83 = vtos %v82
    %s84 = sadd.f32 %s71, %s83
    %s85 = scalar_lea.smem [#allocation2], 0
    %86 = sst [smem:[%s85]] %s84
    %s87 = sld [smem:[#allocation2 + $0x1]]
    %v88 = vmul.f32 %v67, %v64
    %v89 = vsel %vm73, %v88, 0.0
    %90 = vadd.xlane.f32.xlu0 %v89
    %v91 = vpop.xlane.xlu0 %90
    %v92 = vrot.slane %v91, 4
    %v93 = vadd.f32 %v91, %v92
    %v94 = vrot.slane %v93, 2
    %v95 = vadd.f32 %v93, %v94
    %v96 = vrot.slane %v95, 1
    %v97 = vadd.f32 %v95, %v96
    %s98 = vtos %v97
    %s99 = sadd.f32 %s87, %s98
    %s100 = scalar_lea.smem [#allocation2], 1
    %101 = sst [smem:[%s100]] %s99
    %s102 = sld [smem:[#allocation2 + $0x2]]
    %v103 = vmul.f32 %v70, %v64
    %v104 = vsel %vm73, %v103, 0.0
    %105 = vadd.xlane.f32.xlu0 %v104
    %v106 = vpop.xlane.xlu0 %105
    %v107 = vrot.slane %v106, 4
    %v108 = vadd.f32 %v106, %v107
    %v109 = vrot.slane %v108, 2
    %v110 = vadd.f32 %v108, %v109
    %v111 = vrot.slane %v110, 1
    %v112 = vadd.f32 %v110, %v111
    %s113 = vtos %v112
    %s114 = sadd.f32 %s102, %s113
    %s115 = scalar_lea.smem [#allocation2], 2
    %116 = sst [smem:[%s115]] %s114
    %s117 = sld [smem:[#allocation2 + $0x3]]
    %v118 = vsel %vm73, %v67, 0.0
    %119 = vadd.xlane.f32.xlu0 %v118
    %v120 = vpop.xlane.xlu0 %119
    %v121 = vrot.slane %v120, 4
    %v122 = vadd.f32 %v120, %v121
    %v123 = vrot.slane %v122, 2
    %v124 = vadd.f32 %v122, %v123
    %v125 = vrot.slane %v124, 1
    %v126 = vadd.f32 %v124, %v125
    %s127 = vtos %v126
    %s128 = sadd.f32 %s117, %s127
    %s129 = scalar_lea.smem [#allocation2], 3
    %130 = sst [smem:[%s129]] %s128
    %s131 = sld [smem:[#allocation2 + $0x4]]
    %v132 = vsel %vm73, %v70, 0.0
    %133 = vadd.xlane.f32.xlu0 %v132
    %v134 = vpop.xlane.xlu0 %133
    %v135 = vrot.slane %v134, 4
    %v136 = vadd.f32 %v134, %v135
    %v137 = vrot.slane %v136, 2
    %v138 = vadd.f32 %v136, %v137
    %v139 = vrot.slane %v138, 1
    %v140 = vadd.f32 %v138, %v139
    %s141 = vtos %v140
    %s142 = sadd.f32 %s131, %s141
    %s143 = scalar_lea.smem [#allocation2], 4
    %144 = sst [smem:[%s143]] %s142
    // Predicated region
    $region18: #{tpu_custom_call.1} parent=1 // pred_check
      %p145 = pneg %p24
    $region19: #{tpu_custom_call.1} parent=1 // pred_check_branch
      %147 = sbr.rel (%p145) target = $region21
    $region20: #{tpu_custom_call.1} parent=1 // pred_region
      %s148 = sld [smem:[#allocation2 + $0x3]]
      %s149 = smax.f32 %s148, 1.0
      %s150 = sld [smem:[#allocation2 + $0x4]]
      %s151 = smax.f32 %s150, 1.0
      %s152 = sld [smem:[#allocation2]]
      %v153 = vstv %s149
      %v154 = vrcp.pop %v153
      %s155 = vtos %v154
      %s156 = smul.f32 %s152, %s155
      %s157 = sld [smem:[#allocation2 + $0x1]]
      %v158 = vstv %s149
      %v159 = vrcp.pop %v158
      %s160 = vtos %v159
      %s161 = smul.f32 %s157, %s160
      %s162 = sld [smem:[#allocation2 + $0x2]]
      %v163 = vstv %s151
      %v164 = vrcp.pop %v163
      %s165 = vtos %v164
      %s166 = smul.f32 %s162, %s165
      %s167 = smul.f32 %s156, 0.3
      %s168 = smul.f32 %s161, -0.3
      %s169 = sadd.f32 %s168, %s166
      %s170 = sadd.f32 %s167, %s169
      %s171 = scalar_lea.smem [#allocation6], 0
      %172 = sst [smem:[%s171]] %s170
    $region21: #{tpu_custom_call.1} parent=1 // pred_fallthru
      _
    // Predicated region
    $region22: #{tpu_custom_call.1} parent=1 // pred_check
      _
    $region23: #{tpu_custom_call.1} parent=1 // pred_check_branch
      %174 = sbr.rel (0) target = $region25
    $region24: #{tpu_custom_call.1} parent=1 // pred_region
      %s176 = ssub.s32 16, 16
      %177 = vsyncadd [#allocation5], %s176
      %180 = dma.smem_to_hbm [#allocation6], 16, %s2, [#allocation5]
    $region25: #{tpu_custom_call.1} parent=1 // pred_fallthru
      _
    // Predicated region
    $region26: #{tpu_custom_call.1} parent=1 // pred_check
      _
    $region27: #{tpu_custom_call.1} parent=1 // pred_check_branch
      %182 = sbr.rel (0) target = $region29
    $region28: #{tpu_custom_call.1} parent=1 // pred_region
      %183 = dma.done [#allocation5], 16
    $region29: #{tpu_custom_call.1} parent=1 // pred_fallthru
      _
    %184 = sfence
    %185 = vsyncpa [#allocation4], 1
    %186 = vsyncpa [#allocation5], 1

</llo_original>
